<compile_context>
chip_gen: v7x
topology: tpu7x:2x2x1
jax: 0.10.0
libtpu: 0.0.40
codegen_flags: <defaults>
</compile_context>

<pallas_src>
import jax
import jax.numpy as jnp
from jax.experimental import pallas as pl
from jax.experimental.pallas import tpu as pltpu

BN_EPS = 1e-5
LRELU_SLOPE = 0.2
STORE_DTYPE = jnp.bfloat16   # storage / MXU dtype of the big operands (x, h, weights)
MAX_BATCH_TILE = 2048        # batch rows per grid step (VMEM-safe on v5e/v6e/v7x)


def _round_up(n, m):
    return ((n + m - 1) // m) * m


def _pick_batch_tile(b):
    if b <= 16:
        return _round_up(b, 8)
    # >= 2 tiles so dimension_semantics=("parallel",) can shard across v7x's 2 TCs,
    # while keeping each tile <= MAX_BATCH_TILE and batch padding small.
    n = max(2, -(-b // MAX_BATCH_TILE))
    return _round_up(-(-b // n), 8)


# ---- pass 1: conv1 (im2col folded into the weight) + condition term + BN sums ----
def _conv1_stats_kernel(xf_ref, c_ref, wx_ref, wc_ref, h_ref, stats_ref):
    # xf_ref: (TB, C1*16) bf16   c_ref: (TB, cond_dim) bf16
    # wx_ref: (C1*16, HP) bf16   wc_ref: (cond_dim, HP) bf16
    # h_ref:  (TB, HP) bf16 out  stats_ref: (8, HP) f32 out (per-tile partials)
    h = jnp.dot(xf_ref[...], wx_ref[...], preferred_element_type=jnp.float32)
    h = h + jnp.dot(c_ref[...], wc_ref[...], preferred_element_type=jnp.float32)
    h_ref[...] = h.astype(h_ref.dtype)
    s = jnp.sum(h, axis=0, keepdims=True)          # per-lane sum        (1, HP)
    s2 = jnp.sum(h * h, axis=0, keepdims=True)     # per-lane sum-of-sq  (1, HP)
    stats_ref[...] = jnp.concatenate(
        [s, s2, jnp.zeros((6, s.shape[-1]), jnp.float32)], axis=0)


# ---- pass 2: folded BatchNorm + LeakyReLU + conv2 as a single matmul ----
def _bn_lrelu_conv2_kernel(h_ref, scale_ref, shift_ref, w2_ref, const_ref, out_ref):
    a = h_ref[...].astype(jnp.float32) * scale_ref[...] + shift_ref[...]   # BN
    a = jnp.where(a > 0, a, LRELU_SLOPE * a)                               # LeakyReLU
    out = jnp.dot(a.astype(w2_ref.dtype), w2_ref[...],
                  preferred_element_type=jnp.float32)
    out_ref[...] = out + const_ref[...]            # lane-dense (TB, 128) store


def init_params(key, in_chans, condition_dim, out_chans):
    c1 = in_chans * 8
    cin = c1 + condition_dim
    k1, k2, k3, k4 = jax.random.split(key, 4)
    return {
        # PyTorch conv weight layouts: (out, in, kh, kw)
        "w1": jax.random.normal(k1, (c1, cin, 2, 2), jnp.float32) * 0.05,
        "b1": jax.random.normal(k2, (c1,), jnp.float32) * 0.05,
        "gamma": jnp.ones((c1,), jnp.float32),
        "beta": jnp.zeros((c1,), jnp.float32),
        "w2": jax.random.normal(k3, (out_chans, c1, 4, 4), jnp.float32) * 0.05,
        "b2": jax.random.normal(k4, (out_chans,), jnp.float32) * 0.05,
    }


@jax.jit
def cond_discriminator_forward(x, c, params):
    """x: [B, 8*in_chans, 4, 4] NCHW, c: [B, condition_dim] -> [B, out_chans, 1, 1]."""
    B, xch, H, W = x.shape
    assert (H, W) == (4, 4)
    cond_dim = c.shape[-1]
    c1 = params["w1"].shape[0]
    assert xch == c1
    out_chans = params["w2"].shape[0]

    c1p = _round_up(c1, 32)          # pad channels so 4*c1p is a multiple of 128
    hp = 4 * c1p                     # lane width of h (4 centre positions concat)
    xf = c1 * 16                     # NCHW-flattened x features (multiple of 128)
    outp = _round_up(out_chans, 128)

    tb = _pick_batch_tile(B)
    bp = _round_up(B, tb)
    n_tiles = bp // tb

    # --- weight folding (tiny, grid-invariant; fused XLA ops under jit) ---
    # TODO(synk): the weight refold + BN scale/shift fold below stay as tiny XLA
    # ops (O(KB), grid-invariant); a Pallas kernel for them would only add overhead.
    # conv1 with im2col folded in: wx[c*16 + i*4 + j, q*c1p + o] = w1[o, c, kh, kw]
    # for the 4 centre output positions q (others see only zero padding).
    w1x = params["w1"][:, :c1].transpose(1, 2, 3, 0)            # (c, kh, kw, o)
    wx = jnp.zeros((c1, 4, 4, 4, c1p), jnp.float32)             # (c, i, j, q, o)
    for q in range(4):
        i0, j0 = 2 * (q // 2), 2 * (q % 2)
        wx = wx.at[:, i0:i0 + 2, j0:j0 + 2, q, :c1].set(w1x)
    wx = wx.reshape(xf, hp).astype(STORE_DTYPE)

    # condition channels are spatially constant -> contribution is c @ Wc where
    # Wc is the per-output-channel sum of the 2x2 kernel (same for every q).
    wc_sum = jnp.sum(params["w1"][:, c1:], axis=(2, 3)).T       # (cond_dim, c1)
    wc = jnp.zeros((cond_dim, 4, c1p), jnp.float32)
    wc = wc.at[:, :, :c1].set(
        jnp.broadcast_to(wc_sum[:, None, :], (cond_dim, 4, c1)))
    wc = wc.reshape(cond_dim, hp).astype(STORE_DTYPE)

    # conv2 split into the 4 centre positions (one (hp, outp) matrix) and the
    # summed 12 zero-pad positions (handled analytically via `const`).
    w2_pos = params["w2"].transpose(2, 3, 1, 0)                 # (ph, pw, o, oc)
    w2_center = w2_pos[1:3, 1:3].reshape(4, c1, out_chans)      # q = (ph-1)*2+(pw-1)
    w2_pad = w2_pos.reshape(16, c1, out_chans).sum(0) - w2_center.sum(0)
    w2c = jnp.zeros((4, c1p, outp), jnp.float32)
    w2c = w2c.at[:, :c1, :out_chans].set(w2_center)
    w2c = w2c.reshape(hp, outp).astype(STORE_DTYPE)

    # --- inputs: NCHW flatten of x (contiguous, free) + raw condition ---
    xf_p = jnp.pad(x.reshape(B, xf).astype(STORE_DTYPE), ((0, bp - B), (0, 0)))
    c_p = jnp.pad(c.astype(STORE_DTYPE), ((0, bp - B), (0, 0)))

    # ---- pass 1: conv1 + condition term, emit h (bf16) + per-tile BN partials ----
    h, stats_part = pl.pallas_call(
        _conv1_stats_kernel,
        out_shape=(jax.ShapeDtypeStruct((bp, hp), STORE_DTYPE),
                   jax.ShapeDtypeStruct((n_tiles * 8, hp), jnp.float32)),
        grid=(n_tiles,),
        in_specs=[pl.BlockSpec((tb, xf), lambda i: (i, 0)),
                  pl.BlockSpec((tb, cond_dim), lambda i: (i, 0)),
                  pl.BlockSpec((xf, hp), lambda i: (0, 0)),
                  pl.BlockSpec((cond_dim, hp), lambda i: (0, 0))],
        out_specs=(pl.BlockSpec((tb, hp), lambda i: (i, 0)),
                   pl.BlockSpec((8, hp), lambda i: (i, 0))),
        compiler_params=pltpu.CompilerParams(dimension_semantics=("parallel",)),
    )(xf_p, c_p, wx, wc)

    # ---- grid-invariant BN fold (hoisted out of the per-tile kernels) ----
    sums = stats_part.reshape(n_tiles, 8, hp)[:, :2].sum(axis=0)   # (2, hp)
    sums = sums.reshape(2, 4, c1p).sum(axis=1)                     # fold 4 positions
    inv_n = 1.0 / (16.0 * B)        # padded batch rows contribute exact zeros
    mean = sums[0] * inv_n
    var = jnp.maximum(sums[1] * inv_n - mean * mean, 0.0)          # one-pass, clamped
    gamma_p = jnp.pad(params["gamma"], (0, c1p - c1))
    beta_p = jnp.pad(params["beta"], (0, c1p - c1))
    # conv1 bias dropped: exactly cancelled by training-mode BN mean subtraction.
    scale = gamma_p * jax.lax.rsqrt(var + BN_EPS)
    shift = beta_p - mean * scale
    scale4 = jnp.tile(scale, 4).reshape(1, hp)
    shift4 = jnp.tile(shift, 4).reshape(1, hp)
    # the 12 conv1 outputs seeing only zero padding normalize to `shift`; their
    # conv2 contribution is one constant row shared by every sample.
    pad_act = jnp.where(shift > 0, shift, LRELU_SLOPE * shift)[:c1]
    const = pad_act @ w2_pad + params["b2"]                        # (out_chans,)
    const_p = jnp.zeros((1, outp), jnp.float32).at[0, :out_chans].set(const)

    # ---- pass 2: BN + LeakyReLU + conv2 as one (TB, hp) @ (hp, outp) matmul ----
    out = pl.pallas_call(
        _bn_lrelu_conv2_kernel,
        out_shape=jax.ShapeDtypeStruct((bp, outp), jnp.float32),
        grid=(n_tiles,),
        in_specs=[pl.BlockSpec((tb, hp), lambda i: (i, 0)),
                  pl.BlockSpec((1, hp), lambda i: (0, 0)),
                  pl.BlockSpec((1, hp), lambda i: (0, 0)),
                  pl.BlockSpec((hp, outp), lambda i: (0, 0)),
                  pl.BlockSpec((1, outp), lambda i: (0, 0))],
        out_specs=pl.BlockSpec((tb, outp), lambda i: (i, 0)),
        compiler_params=pltpu.CompilerParams(dimension_semantics=("parallel",)),
    )(h, scale4, shift4, w2c, const_p)

    return out[:B, :out_chans].reshape(B, out_chans, 1, 1)


def reference_forward(x, c, params):
    """Pure-JAX f32 reference (lax convolutions, NCHW / OIHW, training-mode BN)."""
    B = x.shape[0]
    cond_dim = c.shape[-1]
    hpsn = jax.lax.Precision.HIGHEST
    c_rep = jnp.broadcast_to(c.reshape(B, cond_dim, 1, 1), (B, cond_dim, 4, 4))
    xc = jnp.concatenate([x, c_rep], axis=1)
    h = jax.lax.conv_general_dilated(
        xc, params["w1"], window_strides=(2, 2), padding=((2, 2), (2, 2)),
        dimension_numbers=("NCHW", "OIHW", "NCHW"), precision=hpsn)
    h = h + params["b1"][None, :, None, None]
    mean = jnp.mean(h, axis=(0, 2, 3), keepdims=True)
    var = jnp.mean((h - mean) ** 2, axis=(0, 2, 3), keepdims=True)
    h = (h - mean) / jnp.sqrt(var + BN_EPS)
    h = h * params["gamma"][None, :, None, None] + params["beta"][None, :, None, None]
    h = jnp.where(h > 0, h, LRELU_SLOPE * h)
    out = jax.lax.conv_general_dilated(
        h, params["w2"], window_strides=(4, 4), padding="VALID",
        dimension_numbers=("NCHW", "OIHW", "NCHW"), precision=hpsn)
    return out + params["b2"][None, :, None, None]


if __name__ == "__main__":
    in_chans = 4          # conv channels C1 = 32 -> h lane width 4*C1 = 128
    condition_dim = 16
    out_chans = 3
    B = 2

    key = jax.random.PRNGKey(0)
    kx, kc, kparam = jax.random.split(key, 3)
    x = jax.random.normal(kx, (B, in_chans * 8, 4, 4), jnp.float32)
    c = jax.random.normal(kc, (B, condition_dim), jnp.float32)
    params = init_params(kparam, in_chans, condition_dim, out_chans)

    out = jax.block_until_ready(cond_discriminator_forward(x, c, params))
    assert out.shape == (B, out_chans, 1, 1), out.shape

    ref = jax.block_until_ready(reference_forward(x, c, params))
    # bf16 storage/MXU operands (x, h, w1-fold, w2) cost ~1e-2 absolute; with
    # STORE_DTYPE = jnp.float32 the kernel matches the f32 reference to ~1e-5.
    err = float(jnp.max(jnp.abs(out - ref)))
    assert jnp.allclose(out, ref, atol=5e-2, rtol=5e-2), ("mismatch", err)
    print("KERNEL_OK")
</pallas_src>

<mosaic_0001>
module attributes {stable_mosaic.version = 11 : i64} {
  func.func @_conv1_stats_kernel(%arg0: i32, %arg1: memref<8x512xbf16, #tpu.memory_space<vmem>>, %arg2: memref<8x16xbf16, #tpu.memory_space<vmem>>, %arg3: memref<512x128xbf16, #tpu.memory_space<vmem>>, %arg4: memref<16x128xbf16, #tpu.memory_space<vmem>>, %arg5: memref<8x128xbf16, #tpu.memory_space<vmem>>, %arg6: memref<8x128xf32, #tpu.memory_space<vmem>>) attributes {dimension_semantics = [#tpu.dimension_semantics<parallel>], iteration_bounds = array<i64: 1>, scalar_prefetch = 0 : i64, scratch_operands = 0 : i64, tpu.core_type = #tpu.core_type<tc>, window_params = [{transform_indices = @transform_0, window_bounds = array<i64: 8, 512>}, {transform_indices = @transform_1, window_bounds = array<i64: 8, 16>}, {pipeline_mode = #tpu.pipeline_mode<synchronous>, transform_indices = @transform_2, window_bounds = array<i64: 512, 128>}, {pipeline_mode = #tpu.pipeline_mode<synchronous>, transform_indices = @transform_3, window_bounds = array<i64: 16, 128>}, {transform_indices = @transform_4, window_bounds = array<i64: 8, 128>}, {transform_indices = @transform_5, window_bounds = array<i64: 8, 128>}]} {
    %c0 = arith.constant 0 : index
    %c0_0 = arith.constant 0 : index
    %0 = vector.load %arg1[%c0, %c0_0] : memref<8x512xbf16, #tpu.memory_space<vmem>>, vector<8x512xbf16>
    %c0_1 = arith.constant 0 : index
    %c0_2 = arith.constant 0 : index
    %1 = vector.load %arg3[%c0_1, %c0_2] : memref<512x128xbf16, #tpu.memory_space<vmem>>, vector<512x128xbf16>
    %cst = arith.constant dense<0.000000e+00> : vector<8x128xf32>
    %2 = tpu.matmul %0, %1, %cst {dimension_numbers = #tpu.dot_dimension_numbers<[1], [0], [0], [1], [0, 0, 1, 1], [], []>} : vector<8x512xbf16>, vector<512x128xbf16>, vector<8x128xf32> -> vector<8x128xf32>
    %c0_3 = arith.constant 0 : index
    %c0_4 = arith.constant 0 : index
    %3 = vector.load %arg2[%c0_3, %c0_4] : memref<8x16xbf16, #tpu.memory_space<vmem>>, vector<8x16xbf16>
    %c0_5 = arith.constant 0 : index
    %c0_6 = arith.constant 0 : index
    %4 = vector.load %arg4[%c0_5, %c0_6] : memref<16x128xbf16, #tpu.memory_space<vmem>>, vector<16x128xbf16>
    %cst_7 = arith.constant dense<0.000000e+00> : vector<8x128xf32>
    %5 = tpu.matmul %3, %4, %cst_7 {dimension_numbers = #tpu.dot_dimension_numbers<[1], [0], [0], [1], [0, 0, 1, 1], [], []>} : vector<8x16xbf16>, vector<16x128xbf16>, vector<8x128xf32> -> vector<8x128xf32>
    %6 = arith.addf %2, %5 : vector<8x128xf32>
    %7 = arith.truncf %6 : vector<8x128xf32> to vector<8x128xbf16>
    %c0_8 = arith.constant 0 : index
    %c0_9 = arith.constant 0 : index
    %8 = vector.load %arg5[%c0_8, %c0_9] : memref<8x128xbf16, #tpu.memory_space<vmem>>, vector<8x128xbf16>
    tpu.vector_store %arg5[%c0_8, %c0_9], %7 {strides = array<i32>} : memref<8x128xbf16, #tpu.memory_space<vmem>>, vector<8x128xbf16>,
    %cst_10 = arith.constant dense<0.000000e+00> : vector<128xf32>
    %9 = vector.multi_reduction <add>, %6, %cst_10 [0] : vector<8x128xf32> to vector<128xf32>
    %10 = vector.shape_cast %9 : vector<128xf32> to vector<1x128xf32>
    %11 = arith.mulf %6, %6 : vector<8x128xf32>
    %cst_11 = arith.constant dense<0.000000e+00> : vector<128xf32>
    %12 = vector.multi_reduction <add>, %11, %cst_11 [0] : vector<8x128xf32> to vector<128xf32>
    %13 = vector.shape_cast %12 : vector<128xf32> to vector<1x128xf32>
    %cst_12 = arith.constant 0.000000e+00 : f32
    %14 = vector.broadcast %cst_12 : f32 to vector<6x128xf32>
    %15 = tpu.concatenate %10, %13, %14 in 0 : vector<1x128xf32>, vector<1x128xf32>, vector<6x128xf32> -> vector<8x128xf32>
    %c0_13 = arith.constant 0 : index
    %c0_14 = arith.constant 0 : index
    %16 = vector.load %arg6[%c0_13, %c0_14] : memref<8x128xf32, #tpu.memory_space<vmem>>, vector<8x128xf32>
    tpu.vector_store %arg6[%c0_13, %c0_14], %15 {strides = array<i32>} : memref<8x128xf32, #tpu.memory_space<vmem>>, vector<8x128xf32>,
    return
  }
  func.func @transform_0(%arg0: i32) -> (i32, i32) {
    %c0_i32 = arith.constant 0 : i32
    %c0_i32_0 = arith.constant 0 : i32
    return %arg0, %c0_i32 : i32, i32
  }
  func.func @transform_1(%arg0: i32) -> (i32, i32) {
    %c0_i32 = arith.constant 0 : i32
    %c0_i32_0 = arith.constant 0 : i32
    return %arg0, %c0_i32 : i32, i32
  }
  func.func @transform_2(%arg0: i32) -> (i32, i32) {
    %c0_i32 = arith.constant 0 : i32
    %c0_i32_0 = arith.constant 0 : i32
    %c0_i32_1 = arith.constant 0 : i32
    return %c0_i32, %c0_i32_0 : i32, i32
  }
  func.func @transform_3(%arg0: i32) -> (i32, i32) {
    %c0_i32 = arith.constant 0 : i32
    %c0_i32_0 = arith.constant 0 : i32
    %c0_i32_1 = arith.constant 0 : i32
    return %c0_i32, %c0_i32_0 : i32, i32
  }
  func.func @transform_4(%arg0: i32) -> (i32, i32) {
    %c0_i32 = arith.constant 0 : i32
    %c0_i32_0 = arith.constant 0 : i32
    return %arg0, %c0_i32 : i32, i32
  }
  func.func @transform_5(%arg0: i32) -> (i32, i32) {
    %c0_i32 = arith.constant 0 : i32
    %c0_i32_0 = arith.constant 0 : i32
    return %arg0, %c0_i32 : i32, i32
  }
}

module attributes {stable_mosaic.version = 11 : i64} {
  func.func @_bn_lrelu_conv2_kernel(%arg0: i32, %arg1: memref<8x128xbf16, #tpu.memory_space<vmem>>, %arg2: memref<1x128xf32, #tpu.memory_space<vmem>>, %arg3: memref<1x128xf32, #tpu.memory_space<vmem>>, %arg4: memref<128x128xbf16, #tpu.memory_space<vmem>>, %arg5: memref<1x128xf32, #tpu.memory_space<vmem>>, %arg6: memref<8x128xf32, #tpu.memory_space<vmem>>) attributes {dimension_semantics = [#tpu.dimension_semantics<parallel>], iteration_bounds = array<i64: 1>, scalar_prefetch = 0 : i64, scratch_operands = 0 : i64, tpu.core_type = #tpu.core_type<tc>, window_params = [{transform_indices = @transform_0, window_bounds = array<i64: 8, 128>}, {pipeline_mode = #tpu.pipeline_mode<synchronous>, transform_indices = @transform_1, window_bounds = array<i64: 1, 128>}, {pipeline_mode = #tpu.pipeline_mode<synchronous>, transform_indices = @transform_2, window_bounds = array<i64: 1, 128>}, {pipeline_mode = #tpu.pipeline_mode<synchronous>, transform_indices = @transform_3, window_bounds = array<i64: 128, 128>}, {pipeline_mode = #tpu.pipeline_mode<synchronous>, transform_indices = @transform_4, window_bounds = array<i64: 1, 128>}, {transform_indices = @transform_5, window_bounds = array<i64: 8, 128>}]} {
    %c0 = arith.constant 0 : index
    %c0_0 = arith.constant 0 : index
    %0 = vector.load %arg1[%c0, %c0_0] : memref<8x128xbf16, #tpu.memory_space<vmem>>, vector<8x128xbf16>
    %1 = arith.extf %0 : vector<8x128xbf16> to vector<8x128xf32>
    %c0_1 = arith.constant 0 : index
    %c0_2 = arith.constant 0 : index
    %2 = vector.load %arg2[%c0_1, %c0_2] : memref<1x128xf32, #tpu.memory_space<vmem>>, vector<1x128xf32>
    %3 = vector.broadcast %2 : vector<1x128xf32> to vector<8x128xf32>
    %4 = arith.mulf %1, %3 : vector<8x128xf32>
    %c0_3 = arith.constant 0 : index
    %c0_4 = arith.constant 0 : index
    %5 = vector.load %arg3[%c0_3, %c0_4] : memref<1x128xf32, #tpu.memory_space<vmem>>, vector<1x128xf32>
    %6 = vector.broadcast %5 : vector<1x128xf32> to vector<8x128xf32>
    %7 = arith.addf %4, %6 : vector<8x128xf32>
    %cst = arith.constant 0.000000e+00 : f32
    %8 = vector.broadcast %cst : f32 to vector<8x128xf32>
    %9 = arith.cmpf ogt, %7, %8 : vector<8x128xf32>
    %cst_5 = arith.constant 2.000000e-01 : f32
    %10 = vector.broadcast %cst_5 : f32 to vector<8x128xf32>
    %11 = arith.mulf %10, %7 : vector<8x128xf32>
    %12 = arith.select %9, %7, %11 : vector<8x128xi1>, vector<8x128xf32>
    %13 = arith.truncf %12 : vector<8x128xf32> to vector<8x128xbf16>
    %c0_6 = arith.constant 0 : index
    %c0_7 = arith.constant 0 : index
    %14 = vector.load %arg4[%c0_6, %c0_7] : memref<128x128xbf16, #tpu.memory_space<vmem>>, vector<128x128xbf16>
    %cst_8 = arith.constant dense<0.000000e+00> : vector<8x128xf32>
    %15 = tpu.matmul %13, %14, %cst_8 {dimension_numbers = #tpu.dot_dimension_numbers<[1], [0], [0], [1], [0, 0, 1, 1], [], []>} : vector<8x128xbf16>, vector<128x128xbf16>, vector<8x128xf32> -> vector<8x128xf32>
    %c0_9 = arith.constant 0 : index
    %c0_10 = arith.constant 0 : index
    %16 = vector.load %arg5[%c0_9, %c0_10] : memref<1x128xf32, #tpu.memory_space<vmem>>, vector<1x128xf32>
    %17 = vector.broadcast %16 : vector<1x128xf32> to vector<8x128xf32>
    %18 = arith.addf %15, %17 : vector<8x128xf32>
    %c0_11 = arith.constant 0 : index
    %c0_12 = arith.constant 0 : index
    %19 = vector.load %arg6[%c0_11, %c0_12] : memref<8x128xf32, #tpu.memory_space<vmem>>, vector<8x128xf32>
    tpu.vector_store %arg6[%c0_11, %c0_12], %18 {strides = array<i32>} : memref<8x128xf32, #tpu.memory_space<vmem>>, vector<8x128xf32>,
    return
  }
  func.func @transform_0(%arg0: i32) -> (i32, i32) {
    %c0_i32 = arith.constant 0 : i32
    %c0_i32_0 = arith.constant 0 : i32
    return %arg0, %c0_i32 : i32, i32
  }
  func.func @transform_1(%arg0: i32) -> (i32, i32) {
    %c0_i32 = arith.constant 0 : i32
    %c0_i32_0 = arith.constant 0 : i32
    %c0_i32_1 = arith.constant 0 : i32
    return %c0_i32, %c0_i32_0 : i32, i32
  }
  func.func @transform_2(%arg0: i32) -> (i32, i32) {
    %c0_i32 = arith.constant 0 : i32
    %c0_i32_0 = arith.constant 0 : i32
    %c0_i32_1 = arith.constant 0 : i32
    return %c0_i32, %c0_i32_0 : i32, i32
  }
  func.func @transform_3(%arg0: i32) -> (i32, i32) {
    %c0_i32 = arith.constant 0 : i32
    %c0_i32_0 = arith.constant 0 : i32
    %c0_i32_1 = arith.constant 0 : i32
    return %c0_i32, %c0_i32_0 : i32, i32
  }
  func.func @transform_4(%arg0: i32) -> (i32, i32) {
    %c0_i32 = arith.constant 0 : i32
    %c0_i32_0 = arith.constant 0 : i32
    %c0_i32_1 = arith.constant 0 : i32
    return %c0_i32, %c0_i32_0 : i32, i32
  }
  func.func @transform_5(%arg0: i32) -> (i32, i32) {
    %c0_i32 = arith.constant 0 : i32
    %c0_i32_0 = arith.constant 0 : i32
    return %arg0, %c0_i32 : i32, i32
  }
}

</mosaic_0001>

<llo_original>
// kernel: tile.13
$region0: #{tile.13}
  #allocation0 [shape = 's32[1]{0}', space=sflag, size = 0x4, scoped, tag = 'scoped memory for tile.13']
  %s0 = inlined_call_operand.vmem [shape: f32[32], index: 0, kind: input, shape index: {}]
  %s1 = inlined_call_operand.vmem [shape: f32[4,32], index: 1, kind: output, shape index: {}]
  // Predicated region
  $region2: #{tile.13} parent=0 // pred_check
    _
  $region3: #{tile.13} parent=0 // pred_check_branch
    %3 = sbr.rel (0) target = $region5
  $region4: #{tile.13} parent=0 // pred_region
    _
  $region5: #{tile.13} parent=0 // pred_fallthru
    _
  %v4 = vld [vmem:[%s0] ss:$0 sm:$0xff]
  %5 = vst [vmem:[%s1] sm:$0xf] %v4

// kernel: tile.14
$region0: #{tile.14}
  %s0 = inlined_call_operand.vmem [shape: f32[4,32], index: 0, kind: input, shape index: {}]
  %s1 = inlined_call_operand.vmem [shape: f32[1,128], index: 1, kind: output, shape index: {}]
  $region1: #{tile.14} parent=0
    #allocation0 [shape = 'u8[4096]{0}', space=vmem, size = 0x1000, scoped, tag = 'scoped mem for output reshape']
    #allocation1 [shape = 'u8[4096]{0}', space=vmem, size = 0x1000, scoped, tag = 'scoped mem for input reshape']
    %s3 = sshllo.u32 0, 4
    %v4 = vld [vmem:[%s0] sm:%s3]
    %5 = vst [vmem:[#allocation1] sm:%s3] %v4
    %v6 = vld [vmem:[#allocation1] sm:$0x1]
    %vm7 = vcmask 261120
    %8 = vst.msk [vmem:[#allocation0] sm:$0x1] %vm7, %v6
    %s9 = scalar_lea.vmem [#allocation1], 3
    %v10 = vld [vmem:[%s9] sm:$0x1]
    %11 = vrot.lane.b32.xlu0 %v10, 96
    %v12 = vpop.permute.xlu0 %11
    %vm13 = vcmask 1048320
    %14 = vst.msk [vmem:[#allocation0] sm:$0x1] %vm13, %v12
    %s15 = scalar_lea.vmem [#allocation1], 2
    %v16 = vld [vmem:[%s15] sm:$0x1]
    %17 = vrot.lane.b32.xlu0 %v16, 64
    %v18 = vpop.permute.xlu0 %17
    %vm19 = vcmask 785920
    %20 = vst.msk [vmem:[#allocation0] sm:$0x1] %vm19, %v18
    %s21 = scalar_lea.vmem [#allocation1], 1
    %v22 = vld [vmem:[%s21] sm:$0x1]
    %23 = vrot.lane.b32.xlu0 %v22, 32
    %v24 = vpop.permute.xlu0 %23
    %vm25 = vcmask 523520
    %26 = vst.msk [vmem:[#allocation0] sm:$0x1] %vm25, %v24
    %s28 = sshllo.u32 0, 1
    %v30 = vld [vmem:[#allocation0] sm:%s28]
    %s31 = sshllo.u32 0, 1
    %32 = vst [vmem:[%s1] sm:%s31] %v30

// kernel: cond_discriminator_forward.2
$region0: #{cond_discriminator_forward.2}
  #allocation0 [shape = 'u32[]', space=smem, size = 0x4, offset = 0x4, fixed_abs, tag = 'smem constant byte address 0x4 - core index']
  #allocation1 [shape = 'u32[144,128]{1,0:T(1,128)}', space=vmem, size = 0x12000, scoped, tag = 'internal scratch']
  %s0 = inlined_call_operand.vmem [shape: bf16[8,512], index: 0, kind: input, shape index: {}]
  %s1 = inlined_call_operand.vmem [shape: bf16[8,16], index: 1, kind: input, shape index: {}]
  %s2 = inlined_call_operand.vmem [shape: bf16[512,128], index: 2, kind: input, shape index: {}]
  %s3 = inlined_call_operand.vmem [shape: bf16[16,128], index: 3, kind: input, shape index: {}]
  %s4 = inlined_call_operand.vmem [shape: bf16[8,128], index: 4, kind: output, shape index: {0}]
  %s5 = inlined_call_operand.vmem [shape: f32[8,128], index: 5, kind: output, shape index: {1}]
  %6 = xla_tuple %s4, %s5
  %s7 = sld [smem:[#allocation0]]
  $region34: #{cond_discriminator_forward.2} parent=0
    _
  %s9 = ssub.s32 1, %s7
  %s10 = scalar_select 0, %s9, %s7
  // Predicated region
  $region2: #{cond_discriminator_forward.2} parent=0 // pred_check
    _
  $region3: #{cond_discriminator_forward.2} parent=0 // pred_check_branch
    %12 = sbr.rel (0) target = $region5
  $region4: #{cond_discriminator_forward.2} parent=0 // pred_region
    _
  $region5: #{cond_discriminator_forward.2} parent=0 // pred_fallthru
    _
  // Predicated region
  $region6: #{cond_discriminator_forward.2} parent=0 // pred_check
    _
  $region7: #{cond_discriminator_forward.2} parent=0 // pred_check_branch
    %14 = sbr.rel (0) target = $region9
  $region8: #{cond_discriminator_forward.2} parent=0 // pred_region
    _
  $region9: #{cond_discriminator_forward.2} parent=0 // pred_fallthru
    _
  // Predicated region
  $region10: #{cond_discriminator_forward.2} parent=0 // pred_check
    _
  $region11: #{cond_discriminator_forward.2} parent=0 // pred_check_branch
    %16 = sbr.rel (0) target = $region13
  $region12: #{cond_discriminator_forward.2} parent=0 // pred_region
    _
  $region13: #{cond_discriminator_forward.2} parent=0 // pred_fallthru
    _
  // Predicated region
  $region14: #{cond_discriminator_forward.2} parent=0 // pred_check
    _
  $region15: #{cond_discriminator_forward.2} parent=0 // pred_check_branch
    %18 = sbr.rel (0) target = $region17
  $region16: #{cond_discriminator_forward.2} parent=0 // pred_region
    _
  $region17: #{cond_discriminator_forward.2} parent=0 // pred_fallthru
    _
  %v20 = vld [vmem:[%s0] sm:$0xff]
  %v21 = vld [vmem:[%s0 + $0x8] sm:$0xff]
  %v22 = vld [vmem:[%s2] sm:$0xf]
  %v23 = vld [vmem:[%s2 + $0x4] sm:$0xf]
  %v24 = vld [vmem:[%s2 + $0x8] sm:$0xf]
  %v25 = vld [vmem:[%s2 + $0xc] sm:$0xf]
  %v26 = vld [vmem:[%s2 + $0x10] sm:$0xf]
  %v27 = vld [vmem:[%s2 + $0x14] sm:$0xf]
  %v28 = vld [vmem:[%s2 + $0x18] sm:$0xf]
  %v29 = vld [vmem:[%s2 + $0x1c] sm:$0xf]
  %v30 = vld [vmem:[%s2 + $0x20] sm:$0xf]
  %v31 = vld [vmem:[%s2 + $0x24] sm:$0xf]
  %v32 = vld [vmem:[%s2 + $0x28] sm:$0xf]
  %v33 = vld [vmem:[%s2 + $0x2c] sm:$0xf]
  %v34 = vld [vmem:[%s2 + $0x30] sm:$0xf]
  %v35 = vld [vmem:[%s2 + $0x34] sm:$0xf]
  %v36 = vld [vmem:[%s2 + $0x38] sm:$0xf]
  %v37 = vld [vmem:[%s2 + $0x3c] sm:$0xf]
  %v38 = vld [vmem:[%s2 + $0x40] sm:$0xf]
  %v39 = vld [vmem:[%s2 + $0x44] sm:$0xf]
  %v40 = vld [vmem:[%s2 + $0x48] sm:$0xf]
  %v41 = vld [vmem:[%s2 + $0x4c] sm:$0xf]
  %v42 = vld [vmem:[%s2 + $0x50] sm:$0xf]
  %v43 = vld [vmem:[%s2 + $0x54] sm:$0xf]
  %v44 = vld [vmem:[%s2 + $0x58] sm:$0xf]
  %v45 = vld [vmem:[%s2 + $0x5c] sm:$0xf]
  %v46 = vld [vmem:[%s2 + $0x60] sm:$0xf]
  %v47 = vld [vmem:[%s2 + $0x64] sm:$0xf]
  %v48 = vld [vmem:[%s2 + $0x68] sm:$0xf]
  %v49 = vld [vmem:[%s2 + $0x6c] sm:$0xf]
  %v50 = vld [vmem:[%s2 + $0x70] sm:$0xf]
  %v51 = vld [vmem:[%s2 + $0x74] sm:$0xf]
  %v52 = vld [vmem:[%s2 + $0x78] sm:$0xf]
  %v53 = vld [vmem:[%s2 + $0x7c] sm:$0xf]
  %v54 = vld [vmem:[%s2 + $0x80] sm:$0xf]
  %v55 = vld [vmem:[%s2 + $0x84] sm:$0xf]
  %v56 = vld [vmem:[%s2 + $0x88] sm:$0xf]
  %v57 = vld [vmem:[%s2 + $0x8c] sm:$0xf]
  %v58 = vld [vmem:[%s2 + $0x90] sm:$0xf]
  %v59 = vld [vmem:[%s2 + $0x94] sm:$0xf]
  %v60 = vld [vmem:[%s2 + $0x98] sm:$0xf]
  %v61 = vld [vmem:[%s2 + $0x9c] sm:$0xf]
  %v62 = vld [vmem:[%s2 + $0xa0] sm:$0xf]
  %v63 = vld [vmem:[%s2 + $0xa4] sm:$0xf]
  %v64 = vld [vmem:[%s2 + $0xa8] sm:$0xf]
  %v65 = vld [vmem:[%s2 + $0xac] sm:$0xf]
  %v66 = vld [vmem:[%s2 + $0xb0] sm:$0xf]
  %v67 = vld [vmem:[%s2 + $0xb4] sm:$0xf]
  %v68 = vld [vmem:[%s2 + $0xb8] sm:$0xf]
  %v69 = vld [vmem:[%s2 + $0xbc] sm:$0xf]
  %v70 = vld [vmem:[%s2 + $0xc0] sm:$0xf]
  %v71 = vld [vmem:[%s2 + $0xc4] sm:$0xf]
  %v72 = vld [vmem:[%s2 + $0xc8] sm:$0xf]
  %v73 = vld [vmem:[%s2 + $0xcc] sm:$0xf]
  %v74 = vld [vmem:[%s2 + $0xd0] sm:$0xf]
  %v75 = vld [vmem:[%s2 + $0xd4] sm:$0xf]
  %v76 = vld [vmem:[%s2 + $0xd8] sm:$0xf]
  %v77 = vld [vmem:[%s2 + $0xdc] sm:$0xf]
  %v78 = vld [vmem:[%s2 + $0xe0] sm:$0xf]
  %v79 = vld [vmem:[%s2 + $0xe4] sm:$0xf]
  %v80 = vld [vmem:[%s2 + $0xe8] sm:$0xf]
  %v81 = vld [vmem:[%s2 + $0xec] sm:$0xf]
  %v82 = vld [vmem:[%s2 + $0xf0] sm:$0xf]
  %v83 = vld [vmem:[%s2 + $0xf4] sm:$0xf]
  %v84 = vld [vmem:[%s2 + $0xf8] sm:$0xf]
  %v85 = vld [vmem:[%s2 + $0xfc] sm:$0xf]
  %v86 = vld [vmem:[%s1] sm:$0xf]
  %v87 = vld [vmem:[%s3] sm:$0xf]
  %v88 = vld [vmem:[%s3 + $0x4] sm:$0xf]
  %v91 = vunpack.c.l.b16 %v87
  %v92 = vunpack.c.l.b16 %v88
  %v93 = vpack.c.b16 %v92, %v91
  %vm95 = vcmask 130048
  %v97 = vsel %vm95, %v86, 0
  %99 = vmatprep.subr.bf16.mxu0 0
  %100 = vmatpush1.bf16.msra.mxu0 %v93
  %101 = vmatprep.subr.bf16.mxu0 0
  %102 = vmatpush1.bf16.msra.mxu0 0
  %103 = vmatprep.subr.bf16.mxu0 0
  %104 = vmatpush1.bf16.msra.mxu0 0
  %105 = vmatprep.subr.bf16.mxu0 0
  %106 = vmatpush1.bf16.msra.mxu0 0
  %107 = vmatprep.subr.bf16.mxu0 0
  %108 = vmatpush1.bf16.msra.mxu0 0
  %109 = vmatprep.subr.bf16.mxu0 0
  %110 = vmatpush1.bf16.msra.mxu0 0
  %111 = vmatprep.subr.bf16.mxu0 0
  %112 = vmatpush1.bf16.msra.mxu0 0
  %113 = vmatprep.subr.bf16.mxu0 0
  %114 = vmatpush1.bf16.msra.mxu0 0
  %115 = vmatprep.subr.bf16.mxu0 0
  %116 = vmatpush1.bf16.msra.mxu0 0
  %117 = vmatprep.subr.bf16.mxu0 0
  %118 = vmatpush1.bf16.msra.mxu0 0
  %119 = vmatprep.subr.bf16.mxu0 0
  %120 = vmatpush1.bf16.msra.mxu0 0
  %121 = vmatprep.subr.bf16.mxu0 0
  %122 = vmatpush1.bf16.msra.mxu0 0
  %123 = vmatprep.subr.bf16.mxu0 0
  %124 = vmatpush1.bf16.msra.mxu0 0
  %125 = vmatprep.subr.bf16.mxu0 0
  %126 = vmatpush1.bf16.msra.mxu0 0
  %127 = vmatprep.subr.bf16.mxu0 0
  %128 = vmatpush1.bf16.msra.mxu0 0
  %129 = vmatprep.subr.bf16.mxu0 0
  %130 = vmatpush1.bf16.msra.mxu0 0
  %131 = vmatprep.mubr.bf16.mxu0 0
  %132 = vmatmul.mubr.bf16.gmra.mrb[0].mxu0 %v97
  %v133 = vpop.f32.mrb[0].mxu0
  %v134 = vadd.f32 0.0, %v133
  %v135 = vpop.f32.mrb[0].mxu0
  %v136 = vpop.f32.mrb[0].mxu0
  %v137 = vpop.f32.mrb[0].mxu0
  %138 = vdwg.mxu0
  %v141 = vunpack.c.l.b16 %v20
  %v142 = vunpack.c.h.b16 %v20
  %v143 = vunpack.c.l.b16 %v21
  %v144 = vunpack.c.h.b16 %v21
  %v145 = vpack.c.b16 %v141, %v141
  %v146 = vpack.c.b16 %v142, %v142
  %v147 = vpack.c.b16 %v143, %v143
  %v148 = vpack.c.b16 %v144, %v144
  %v217 = vunpack.c.l.b16 %v22
  %v218 = vunpack.c.l.b16 %v23
  %v219 = vunpack.c.l.b16 %v24
  %v220 = vunpack.c.l.b16 %v25
  %v221 = vunpack.c.l.b16 %v26
  %v222 = vunpack.c.l.b16 %v27
  %v223 = vunpack.c.l.b16 %v28
  %v224 = vunpack.c.l.b16 %v29
  %v225 = vunpack.c.l.b16 %v30
  %v226 = vunpack.c.l.b16 %v31
  %v227 = vunpack.c.l.b16 %v32
  %v228 = vunpack.c.l.b16 %v33
  %v229 = vunpack.c.l.b16 %v34
  %v230 = vunpack.c.l.b16 %v35
  %v231 = vunpack.c.l.b16 %v36
  %v232 = vunpack.c.l.b16 %v37
  %v233 = vunpack.c.l.b16 %v38
  %v234 = vunpack.c.l.b16 %v39
  %v235 = vunpack.c.l.b16 %v40
  %v236 = vunpack.c.l.b16 %v41
  %v237 = vunpack.c.l.b16 %v42
  %v238 = vunpack.c.l.b16 %v43
  %v239 = vunpack.c.l.b16 %v44
  %v240 = vunpack.c.l.b16 %v45
  %v241 = vunpack.c.l.b16 %v46
  %v242 = vunpack.c.l.b16 %v47
  %v243 = vunpack.c.l.b16 %v48
  %v244 = vunpack.c.l.b16 %v49
  %v245 = vunpack.c.l.b16 %v50
  %v246 = vunpack.c.l.b16 %v51
  %v247 = vunpack.c.l.b16 %v52
  %v248 = vunpack.c.l.b16 %v53
  %v249 = vunpack.c.l.b16 %v54
  %v250 = vunpack.c.l.b16 %v55
  %v251 = vunpack.c.l.b16 %v56
  %v252 = vunpack.c.l.b16 %v57
  %v253 = vunpack.c.l.b16 %v58
  %v254 = vunpack.c.l.b16 %v59
  %v255 = vunpack.c.l.b16 %v60
  %v256 = vunpack.c.l.b16 %v61
  %v257 = vunpack.c.l.b16 %v62
  %v258 = vunpack.c.l.b16 %v63
  %v259 = vunpack.c.l.b16 %v64
  %v260 = vunpack.c.l.b16 %v65
  %v261 = vunpack.c.l.b16 %v66
  %v262 = vunpack.c.l.b16 %v67
  %v263 = vunpack.c.l.b16 %v68
  %v264 = vunpack.c.l.b16 %v69
  %v265 = vunpack.c.l.b16 %v70
  %v266 = vunpack.c.l.b16 %v71
  %v267 = vunpack.c.l.b16 %v72
  %v268 = vunpack.c.l.b16 %v73
  %v269 = vunpack.c.l.b16 %v74
  %v270 = vunpack.c.l.b16 %v75
  %v271 = vunpack.c.l.b16 %v76
  %v272 = vunpack.c.l.b16 %v77
  %v273 = vunpack.c.l.b16 %v78
  %v274 = vunpack.c.l.b16 %v79
  %v275 = vunpack.c.l.b16 %v80
  %v276 = vunpack.c.l.b16 %v81
  %v277 = vunpack.c.l.b16 %v82
  %v278 = vunpack.c.l.b16 %v83
  %v279 = vunpack.c.l.b16 %v84
  %v280 = vunpack.c.l.b16 %v85
  %v281 = vpack.c.b16 %v218, %v217
  %v282 = vpack.c.b16 %v220, %v219
  %v283 = vpack.c.b16 %v222, %v221
  %v284 = vpack.c.b16 %v224, %v223
  %v285 = vpack.c.b16 %v226, %v225
  %v286 = vpack.c.b16 %v228, %v227
  %v287 = vpack.c.b16 %v230, %v229
  %v288 = vpack.c.b16 %v232, %v231
  %v289 = vpack.c.b16 %v234, %v233
  %v290 = vpack.c.b16 %v236, %v235
  %v291 = vpack.c.b16 %v238, %v237
  %v292 = vpack.c.b16 %v240, %v239
  %v293 = vpack.c.b16 %v242, %v241
  %v294 = vpack.c.b16 %v244, %v243
  %v295 = vpack.c.b16 %v246, %v245
  %v296 = vpack.c.b16 %v248, %v247
  %v297 = vpack.c.b16 %v250, %v249
  %v298 = vpack.c.b16 %v252, %v251
  %v299 = vpack.c.b16 %v254, %v253
  %v300 = vpack.c.b16 %v256, %v255
  %v301 = vpack.c.b16 %v258, %v257
  %v302 = vpack.c.b16 %v260, %v259
  %v303 = vpack.c.b16 %v262, %v261
  %v304 = vpack.c.b16 %v264, %v263
  %v305 = vpack.c.b16 %v266, %v265
  %v306 = vpack.c.b16 %v268, %v267
  %v307 = vpack.c.b16 %v270, %v269
  %v308 = vpack.c.b16 %v272, %v271
  %v309 = vpack.c.b16 %v274, %v273
  %v310 = vpack.c.b16 %v276, %v275
  %v311 = vpack.c.b16 %v278, %v277
  %v312 = vpack.c.b16 %v280, %v279
  %345 = vmatprep.subr.bf16.mxu0 0
  %346 = vmatpush1.bf16.msra.mxu0 %v281
  %347 = vmatprep.subr.bf16.mxu0 0
  %348 = vmatpush1.bf16.msra.mxu0 %v282
  %349 = vmatprep.subr.bf16.mxu0 0
  %350 = vmatpush1.bf16.msra.mxu0 %v283
  %351 = vmatprep.subr.bf16.mxu0 0
  %352 = vmatpush1.bf16.msra.mxu0 %v284
  %353 = vmatprep.subr.bf16.mxu0 0
  %354 = vmatpush1.bf16.msra.mxu0 %v285
  %355 = vmatprep.subr.bf16.mxu0 0
  %356 = vmatpush1.bf16.msra.mxu0 %v286
  %357 = vmatprep.subr.bf16.mxu0 0
  %358 = vmatpush1.bf16.msra.mxu0 %v287
  %359 = vmatprep.subr.bf16.mxu0 0
  %360 = vmatpush1.bf16.msra.mxu0 %v288
  %361 = vmatprep.subr.bf16.mxu0 0
  %362 = vmatpush1.bf16.msra.mxu0 %v289
  %363 = vmatprep.subr.bf16.mxu0 0
  %364 = vmatpush1.bf16.msra.mxu0 %v290
  %365 = vmatprep.subr.bf16.mxu0 0
  %366 = vmatpush1.bf16.msra.mxu0 %v291
  %367 = vmatprep.subr.bf16.mxu0 0
  %368 = vmatpush1.bf16.msra.mxu0 %v292
  %369 = vmatprep.subr.bf16.mxu0 0
  %370 = vmatpush1.bf16.msra.mxu0 %v293
  %371 = vmatprep.subr.bf16.mxu0 0
  %372 = vmatpush1.bf16.msra.mxu0 %v294
  %373 = vmatprep.subr.bf16.mxu0 0
  %374 = vmatpush1.bf16.msra.mxu0 %v295
  %375 = vmatprep.subr.bf16.mxu0 0
  %376 = vmatpush1.bf16.msra.mxu0 %v296
  %377 = vmatprep.mubr.bf16.mxu0 %v146
  %378 = vmatmul.mubr.bf16.gmra.mrb[0].mxu0 %v145
  %v379 = vpop.f32.mrb[0].mxu0
  %v380 = vadd.f32 %v134, %v379
  %v381 = vpop.f32.mrb[0].mxu0
  %v382 = vpop.f32.mrb[0].mxu0
  %v383 = vpop.f32.mrb[0].mxu0
  %384 = vdwg.mxu0
  %385 = vmatprep.subr.bf16.mxu0 0
  %386 = vmatpush1.bf16.msra.mxu0 %v297
  %387 = vmatprep.subr.bf16.mxu0 0
  %388 = vmatpush1.bf16.msra.mxu0 %v298
  %389 = vmatprep.subr.bf16.mxu0 0
  %390 = vmatpush1.bf16.msra.mxu0 %v299
  %391 = vmatprep.subr.bf16.mxu0 0
  %392 = vmatpush1.bf16.msra.mxu0 %v300
  %393 = vmatprep.subr.bf16.mxu0 0
  %394 = vmatpush1.bf16.msra.mxu0 %v301
  %395 = vmatprep.subr.bf16.mxu0 0
  %396 = vmatpush1.bf16.msra.mxu0 %v302
  %397 = vmatprep.subr.bf16.mxu0 0
  %398 = vmatpush1.bf16.msra.mxu0 %v303
  %399 = vmatprep.subr.bf16.mxu0 0
  %400 = vmatpush1.bf16.msra.mxu0 %v304
  %401 = vmatprep.subr.bf16.mxu0 0
  %402 = vmatpush1.bf16.msra.mxu0 %v305
  %403 = vmatprep.subr.bf16.mxu0 0
  %404 = vmatpush1.bf16.msra.mxu0 %v306
  %405 = vmatprep.subr.bf16.mxu0 0
  %406 = vmatpush1.bf16.msra.mxu0 %v307
  %407 = vmatprep.subr.bf16.mxu0 0
  %408 = vmatpush1.bf16.msra.mxu0 %v308
  %409 = vmatprep.subr.bf16.mxu0 0
  %410 = vmatpush1.bf16.msra.mxu0 %v309
  %411 = vmatprep.subr.bf16.mxu0 0
  %412 = vmatpush1.bf16.msra.mxu0 %v310
  %413 = vmatprep.subr.bf16.mxu0 0
  %414 = vmatpush1.bf16.msra.mxu0 %v311
  %415 = vmatprep.subr.bf16.mxu0 0
  %416 = vmatpush1.bf16.msra.mxu0 %v312
  %417 = vmatprep.mubr.bf16.mxu0 %v148
  %418 = vmatmul.mubr.bf16.gmra.mrb[0].mxu0 %v147
  %v419 = vpop.f32.mrb[0].mxu0
  %v420 = vadd.f32 %v380, %v419
  %v421 = vpop.f32.mrb[0].mxu0
  %v422 = vpop.f32.mrb[0].mxu0
  %v423 = vpop.f32.mrb[0].mxu0
  %424 = vdwg.mxu0
  %v425 = vpack.c.bf16 %v420, %v420
  %426 = vst [vmem:[%s4] sm:$0xf] %v425
  %v427 = vrot.slane %v420, 4
  %v428 = vadd.f32 %v420, %v427
  %v429 = vrot.slane %v428, 2
  %v430 = vadd.f32 %v428, %v429
  %v431 = vrot.slane %v430, 1
  %v432 = vadd.f32 %v430, %v431
  %v433 = vmul.f32 %v420, %v420
  %v434 = vrot.slane %v433, 4
  %v435 = vadd.f32 %v433, %v434
  %v436 = vrot.slane %v435, 2
  %v437 = vadd.f32 %v435, %v436
  %v438 = vrot.slane %v437, 1
  %v439 = vadd.f32 %v437, %v438
  %vm440 = vcmask 1040384
  %v441 = vsel %vm440, %v432, %v439
  %vm442 = vcmask 1041408
  %v443 = vsel %vm442, %v441, 0.0
  %444 = vst [vmem:[%s5] sm:$0xff] %v443
  // Predicated region
  $region18: #{cond_discriminator_forward.2} parent=0 // pred_check
    _
  $region19: #{cond_discriminator_forward.2} parent=0 // pred_check_branch
    %446 = sbr.rel (0) target = $region21
  $region20: #{cond_discriminator_forward.2} parent=0 // pred_region
    _
  $region21: #{cond_discriminator_forward.2} parent=0 // pred_fallthru
    _
  // Predicated region
  $region22: #{cond_discriminator_forward.2} parent=0 // pred_check
    _
  $region23: #{cond_discriminator_forward.2} parent=0 // pred_check_branch
    %448 = sbr.rel (0) target = $region25
  $region24: #{cond_discriminator_forward.2} parent=0 // pred_region
    _
  $region25: #{cond_discriminator_forward.2} parent=0 // pred_fallthru
    _
  // Predicated region
  $region26: #{cond_discriminator_forward.2} parent=0 // pred_check
    _
  $region27: #{cond_discriminator_forward.2} parent=0 // pred_check_branch
    %450 = sbr.rel (0) target = $region29
  $region28: #{cond_discriminator_forward.2} parent=0 // pred_region
    _
  $region29: #{cond_discriminator_forward.2} parent=0 // pred_fallthru
    _
  // Predicated region
  $region30: #{cond_discriminator_forward.2} parent=0 // pred_check
    _
  $region31: #{cond_discriminator_forward.2} parent=0 // pred_check_branch
    %452 = sbr.rel (0) target = $region33
  $region32: #{cond_discriminator_forward.2} parent=0 // pred_region
    _
  $region33: #{cond_discriminator_forward.2} parent=0 // pred_fallthru
    _

// kernel: cond_discriminator_forward.3
$region0: #{cond_discriminator_forward.3}
  #allocation0 [shape = 'u32[]', space=smem, size = 0x4, offset = 0x4, fixed_abs, tag = 'smem constant byte address 0x4 - core index']
  #allocation1 [shape = 'u32[144,128]{1,0:T(1,128)}', space=vmem, size = 0x12000, scoped, tag = 'internal scratch']
  %s0 = inlined_call_operand.vmem [shape: bf16[8,128], index: 0, kind: input, shape index: {}]
  %s1 = inlined_call_operand.vmem [shape: f32[1,128], index: 1, kind: input, shape index: {}]
  %s2 = inlined_call_operand.vmem [shape: f32[1,128], index: 2, kind: input, shape index: {}]
  %s3 = inlined_call_operand.vmem [shape: bf16[128,128], index: 3, kind: input, shape index: {}]
  %s4 = inlined_call_operand.vmem [shape: f32[1,128], index: 4, kind: input, shape index: {}]
  %s5 = inlined_call_operand.vmem [shape: f32[8,128], index: 5, kind: output, shape index: {}]
  %s6 = sld [smem:[#allocation0]]
  $region30: #{cond_discriminator_forward.3} parent=0
    _
  %s8 = ssub.s32 1, %s6
  %s9 = scalar_select 0, %s8, %s6
  // Predicated region
  $region2: #{cond_discriminator_forward.3} parent=0 // pred_check
    _
  $region3: #{cond_discriminator_forward.3} parent=0 // pred_check_branch
    %11 = sbr.rel (0) target = $region5
  $region4: #{cond_discriminator_forward.3} parent=0 // pred_region
    _
  $region5: #{cond_discriminator_forward.3} parent=0 // pred_fallthru
    _
  // Predicated region
  $region6: #{cond_discriminator_forward.3} parent=0 // pred_check
    _
  $region7: #{cond_discriminator_forward.3} parent=0 // pred_check_branch
    %13 = sbr.rel (0) target = $region9
  $region8: #{cond_discriminator_forward.3} parent=0 // pred_region
    _
  $region9: #{cond_discriminator_forward.3} parent=0 // pred_fallthru
    _
  // Predicated region
  $region10: #{cond_discriminator_forward.3} parent=0 // pred_check
    _
  $region11: #{cond_discriminator_forward.3} parent=0 // pred_check_branch
    %15 = sbr.rel (0) target = $region13
  $region12: #{cond_discriminator_forward.3} parent=0 // pred_region
    _
  $region13: #{cond_discriminator_forward.3} parent=0 // pred_fallthru
    _
  // Predicated region
  $region14: #{cond_discriminator_forward.3} parent=0 // pred_check
    _
  $region15: #{cond_discriminator_forward.3} parent=0 // pred_check_branch
    %17 = sbr.rel (0) target = $region17
  $region16: #{cond_discriminator_forward.3} parent=0 // pred_region
    _
  $region17: #{cond_discriminator_forward.3} parent=0 // pred_fallthru
    _
  // Predicated region
  $region18: #{cond_discriminator_forward.3} parent=0 // pred_check
    _
  $region19: #{cond_discriminator_forward.3} parent=0 // pred_check_branch
    %19 = sbr.rel (0) target = $region21
  $region20: #{cond_discriminator_forward.3} parent=0 // pred_region
    _
  $region21: #{cond_discriminator_forward.3} parent=0 // pred_fallthru
    _
  %v21 = vld [vmem:[%s0] sm:$0xf]
  %v22 = vunpack.c.l.bf16 %v21
  %v23 = vld [vmem:[%s1] sm:$0x1]
  %v25 = vlaneseq
  %v26 = vshrl.u32 %v25, 7
  %v27 = vsub.s32 0, %v26
  %v28 = vrot.slane %v23, %v27
  %v30 = vmul.f32 %v22, %v28
  %v31 = vld [vmem:[%s2] sm:$0x1]
  %v33 = vlaneseq
  %v34 = vshrl.u32 %v33, 7
  %v35 = vsub.s32 0, %v34
  %v36 = vrot.slane %v31, %v35
  %v38 = vadd.f32 %v30, %v36
  %vm39 = vcmp.gt.f32.partialorder %v38, 0.0
  %v40 = vmul.f32 %v38, 0.2
  %v41 = vsel %vm39, %v38, %v40
  %v42 = vpack.c.bf16 %v41, %v41
  %v43 = vld [vmem:[%s3] sm:$0xf]
  %v44 = vld [vmem:[%s3 + $0x4] sm:$0xf]
  %v45 = vld [vmem:[%s3 + $0x8] sm:$0xf]
  %v46 = vld [vmem:[%s3 + $0xc] sm:$0xf]
  %v47 = vld [vmem:[%s3 + $0x10] sm:$0xf]
  %v48 = vld [vmem:[%s3 + $0x14] sm:$0xf]
  %v49 = vld [vmem:[%s3 + $0x18] sm:$0xf]
  %v50 = vld [vmem:[%s3 + $0x1c] sm:$0xf]
  %v51 = vld [vmem:[%s3 + $0x20] sm:$0xf]
  %v52 = vld [vmem:[%s3 + $0x24] sm:$0xf]
  %v53 = vld [vmem:[%s3 + $0x28] sm:$0xf]
  %v54 = vld [vmem:[%s3 + $0x2c] sm:$0xf]
  %v55 = vld [vmem:[%s3 + $0x30] sm:$0xf]
  %v56 = vld [vmem:[%s3 + $0x34] sm:$0xf]
  %v57 = vld [vmem:[%s3 + $0x38] sm:$0xf]
  %v58 = vld [vmem:[%s3 + $0x3c] sm:$0xf]
  %v59 = vld [vmem:[%s4] sm:$0x1]
  %v61 = vlaneseq
  %v62 = vshrl.u32 %v61, 7
  %v63 = vsub.s32 0, %v62
  %v64 = vrot.slane %v59, %v63
  %v82 = vunpack.c.l.b16 %v43
  %v83 = vunpack.c.l.b16 %v44
  %v84 = vunpack.c.l.b16 %v45
  %v85 = vunpack.c.l.b16 %v46
  %v86 = vunpack.c.l.b16 %v47
  %v87 = vunpack.c.l.b16 %v48
  %v88 = vunpack.c.l.b16 %v49
  %v89 = vunpack.c.l.b16 %v50
  %v90 = vunpack.c.l.b16 %v51
  %v91 = vunpack.c.l.b16 %v52
  %v92 = vunpack.c.l.b16 %v53
  %v93 = vunpack.c.l.b16 %v54
  %v94 = vunpack.c.l.b16 %v55
  %v95 = vunpack.c.l.b16 %v56
  %v96 = vunpack.c.l.b16 %v57
  %v97 = vunpack.c.l.b16 %v58
  %v98 = vpack.c.b16 %v83, %v82
  %v99 = vpack.c.b16 %v85, %v84
  %v100 = vpack.c.b16 %v87, %v86
  %v101 = vpack.c.b16 %v89, %v88
  %v102 = vpack.c.b16 %v91, %v90
  %v103 = vpack.c.b16 %v93, %v92
  %v104 = vpack.c.b16 %v95, %v94
  %v105 = vpack.c.b16 %v97, %v96
  %114 = vmatprep.subr.bf16.mxu0 0
  %115 = vmatpush1.bf16.msra.mxu0 %v98
  %116 = vmatprep.subr.bf16.mxu0 0
  %117 = vmatpush1.bf16.msra.mxu0 %v99
  %118 = vmatprep.subr.bf16.mxu0 0
  %119 = vmatpush1.bf16.msra.mxu0 %v100
  %120 = vmatprep.subr.bf16.mxu0 0
  %121 = vmatpush1.bf16.msra.mxu0 %v101
  %122 = vmatprep.subr.bf16.mxu0 0
  %123 = vmatpush1.bf16.msra.mxu0 %v102
  %124 = vmatprep.subr.bf16.mxu0 0
  %125 = vmatpush1.bf16.msra.mxu0 %v103
  %126 = vmatprep.subr.bf16.mxu0 0
  %127 = vmatpush1.bf16.msra.mxu0 %v104
  %128 = vmatprep.subr.bf16.mxu0 0
  %129 = vmatpush1.bf16.msra.mxu0 %v105
  %130 = vmatprep.subr.bf16.mxu0 0
  %131 = vmatpush1.bf16.msra.mxu0 0
  %132 = vmatprep.subr.bf16.mxu0 0
  %133 = vmatpush1.bf16.msra.mxu0 0
  %134 = vmatprep.subr.bf16.mxu0 0
  %135 = vmatpush1.bf16.msra.mxu0 0
  %136 = vmatprep.subr.bf16.mxu0 0
  %137 = vmatpush1.bf16.msra.mxu0 0
  %138 = vmatprep.subr.bf16.mxu0 0
  %139 = vmatpush1.bf16.msra.mxu0 0
  %140 = vmatprep.subr.bf16.mxu0 0
  %141 = vmatpush1.bf16.msra.mxu0 0
  %142 = vmatprep.subr.bf16.mxu0 0
  %143 = vmatpush1.bf16.msra.mxu0 0
  %144 = vmatprep.subr.bf16.mxu0 0
  %145 = vmatpush1.bf16.msra.mxu0 0
  %146 = vmatprep.mubr.bf16.mxu0 0
  %147 = vmatmul.mubr.bf16.gmra.mrb[0].mxu0 %v42
  %v148 = vpop.f32.mrb[0].mxu0
  %v149 = vadd.f32 %v64, %v148
  %v150 = vpop.f32.mrb[0].mxu0
  %v151 = vpop.f32.mrb[0].mxu0
  %v152 = vpop.f32.mrb[0].mxu0
  %153 = vdwg.mxu0
  %154 = vst [vmem:[%s5] sm:$0xff] %v149
  // Predicated region
  $region22: #{cond_discriminator_forward.3} parent=0 // pred_check
    _
  $region23: #{cond_discriminator_forward.3} parent=0 // pred_check_branch
    %156 = sbr.rel (0) target = $region25
  $region24: #{cond_discriminator_forward.3} parent=0 // pred_region
    _
  $region25: #{cond_discriminator_forward.3} parent=0 // pred_fallthru
    _
  // Predicated region
  $region26: #{cond_discriminator_forward.3} parent=0 // pred_check
    _
  $region27: #{cond_discriminator_forward.3} parent=0 // pred_check_branch
    %158 = sbr.rel (0) target = $region29
  $region28: #{cond_discriminator_forward.3} parent=0 // pred_region
    _
  $region29: #{cond_discriminator_forward.3} parent=0 // pred_fallthru
    _

</llo_original>
